<compile_context>
chip_gen: v7x
topology: tpu7x:2x2x1
jax: 0.10.0
libtpu: 0.0.40
codegen_flags: <defaults>
</compile_context>

<pallas_src>
import math

import jax
import jax.numpy as jnp
from jax.experimental import pallas as pl
from jax.experimental.pallas import tpu as pltpu

_BLOCK_BUDGET_BYTES = 4 * 1024 * 1024   # per-block VMEM target
_TARGET_TW = 2048                       # preferred lane-dense tile width


def _msfa_kernel(img_ref, mask_ref, out_ref):
    # img_ref / mask_ref / out_ref: (bb, C, th, tw) VMEM tiles.
    out_ref[...] = img_ref[...] * mask_ref[...]


def _sublane_multiple(itemsize):
    # f32 -> 8, bf16 -> 16, int8/fp8 -> 32 (sublane packing).
    return max(8, 32 // itemsize)


def _pick_fold(H, W, ph):
    """Smallest r (rows folded per lane-row) making the folded width 128-aligned."""
    if W % 128 == 0:
        return 1
    for r in range(1, H + 1):
        if H % r == 0 and r % ph == 0 and (r * W) % 128 == 0:
            return r
    return None


def _pick_tile_cols(Wf, col_period):
    """Largest tw dividing Wf, multiple of lcm(col_period, 128), <= _TARGET_TW."""
    base = math.lcm(col_period, 128)
    if base > Wf or Wf % base != 0:
        return Wf            # full extent: always a legal block width
    best = base
    for mult in range(1, Wf // base + 1):
        tw = base * mult
        if Wf % tw == 0 and tw <= _TARGET_TW:
            best = tw
    return best


def _pick_tile_rows(Hf, row_period, sub, row_bytes):
    """Largest th dividing Hf, multiple of lcm(row_period, sub), within budget."""
    base = math.lcm(row_period, sub)
    if base > Hf or Hf % base != 0:
        return Hf            # full extent (Hf is a multiple of row_period)
    best = base
    for mult in range(1, Hf // base + 1):
        th = base * mult
        if Hf % th == 0 and th * row_bytes <= _BLOCK_BUDGET_BYTES:
            best = th
    return best


def _pick_batch_group(B, block_bytes):
    """Largest bb dividing B with bb * block_bytes within the block budget."""
    best = 1
    for bb in range(1, B + 1):
        if B % bb == 0 and bb * block_bytes <= _BLOCK_BUDGET_BYTES:
            best = bb
    return best


def apply_msfa(img: jax.Array, msfa: jax.Array) -> jax.Array:
    """img: (B, C, H, W); msfa: (C, ph, pw) with H % ph == 0, W % pw == 0."""
    B, C, H, W = img.shape
    c, ph, pw = msfa.shape
    assert c == C, "number of channels must match the MSFA"
    assert H % ph == 0 and W % pw == 0

    msfa = msfa.astype(img.dtype)
    itemsize = img.dtype.itemsize
    sub = _sublane_multiple(itemsize)

    # ---- Fold rows into lanes when W is not a multiple of 128 (lane-dense IO).
    r = _pick_fold(H, W, ph)
    if r is None:
        r = 1                 # no legal fold: fall back to full-width blocks
    Hf, Wf = H // r, r * W
    img_f = img.reshape(B, C, Hf, Wf)

    if r == 1:
        row_period, col_period = ph, pw
        base = msfa                                              # (C, ph, pw)
    else:
        # One folded mask row; identical for every folded row since r % ph == 0.
        row_period, col_period = 1, Wf
        base = jnp.tile(msfa, (1, r // ph, W // pw)).reshape(C, 1, Wf)

    # ---- Tile sizes (tw lane-dense multiple of 128 where possible).
    tw = Wf if r > 1 else _pick_tile_cols(Wf, col_period)
    th = _pick_tile_rows(Hf, row_period, sub, C * tw * itemsize)

    # ---- Group batch items into one block when per-batch tiles are small, so
    # the sequential grid loop has fewer (bigger) steps.
    bb = _pick_batch_group(B, C * th * tw * itemsize)

    # ---- Tile-sized mask: one block of HBM traffic, VMEM-resident thanks to
    # the constant index_map below.  Same shape as the image block so the
    # kernel body is a plain same-shape multiply.
    mask3 = jnp.tile(base, (1, th // base.shape[1], tw // base.shape[2]))   # (C, th, tw)
    mask = jnp.broadcast_to(mask3[None], (bb, C, th, tw))

    grid = (B // bb, Hf // th, Wf // tw)

    out_f = pl.pallas_call(
        _msfa_kernel,
        out_shape=jax.ShapeDtypeStruct((B, C, Hf, Wf), img.dtype),
        grid_spec=pltpu.PrefetchScalarGridSpec(
            num_scalar_prefetch=0,
            grid=grid,
            in_specs=[
                pl.BlockSpec((bb, C, th, tw), lambda b, i, j: (b, 0, i, j)),
                pl.BlockSpec((bb, C, th, tw), lambda b, i, j: (0, 0, 0, 0)),
            ],
            out_specs=pl.BlockSpec((bb, C, th, tw), lambda b, i, j: (b, 0, i, j)),
        ),
        compiler_params=pltpu.CompilerParams(
            dimension_semantics=("parallel", "parallel", "parallel"),
            vmem_limit_bytes=40 * 1024 * 1024,
        ),
        cost_estimate=pl.CostEstimate(
            flops=B * C * H * W,
            transcendentals=0,
            bytes_accessed=2 * B * C * H * W * itemsize + mask.size * itemsize,
        ),
    )(img_f, mask)

    return out_f.reshape(B, C, H, W)


if __name__ == "__main__":
    key = jax.random.PRNGKey(0)

    B, C, H, W = 2, 4, 16, 16
    ph, pw = 2, 2

    # Deterministic MSFA: 2x2 pattern where each spatial position selects
    # exactly one of the 4 spectral channels (Bayer-like 4-band MSFA).
    pos = jnp.arange(ph * pw).reshape(ph, pw)                                  # (2, 2)
    msfa = (jnp.arange(C)[:, None, None] == pos[None]).astype(jnp.float32)     # (C, 2, 2)

    img = jax.random.normal(key, (B, C, H, W), dtype=jnp.float32)

    out = apply_msfa(img, msfa)
    out = jax.block_until_ready(out)

    ref = img * jnp.tile(msfa, (1, H // ph, W // pw))[None]
    assert out.shape == img.shape and out.dtype == img.dtype
    assert jnp.allclose(out, ref, atol=1e-6, rtol=1e-6)

    # Exercise the non-folded (lane-aligned W) path as well.
    W2 = 256
    img2 = jax.random.normal(jax.random.PRNGKey(1), (B, C, H, W2), dtype=jnp.float32)
    out2 = jax.block_until_ready(apply_msfa(img2, msfa))
    ref2 = img2 * jnp.tile(msfa, (1, H // ph, W2 // pw))[None]
    assert jnp.allclose(out2, ref2, atol=1e-6, rtol=1e-6)

    print("KERNEL_OK")
</pallas_src>

<mosaic_0001>
module attributes {stable_mosaic.version = 11 : i64} {
  func.func @_msfa_kernel(%arg0: i32, %arg1: i32, %arg2: i32, %arg3: memref<2x4x2x128xf32, #tpu.memory_space<vmem>>, %arg4: memref<2x4x2x128xf32, #tpu.memory_space<vmem>>, %arg5: memref<2x4x2x128xf32, #tpu.memory_space<vmem>>) attributes {dimension_semantics = [#tpu.dimension_semantics<parallel>, #tpu.dimension_semantics<parallel>, #tpu.dimension_semantics<parallel>], iteration_bounds = array<i64: 1, 1, 1>, scalar_prefetch = 0 : i64, scratch_operands = 0 : i64, tpu.core_type = #tpu.core_type<tc>, window_params = [{transform_indices = @transform_0, window_bounds = array<i64: 2, 4, 2, 128>}, {pipeline_mode = #tpu.pipeline_mode<synchronous>, transform_indices = @transform_1, window_bounds = array<i64: 2, 4, 2, 128>}, {transform_indices = @transform_2, window_bounds = array<i64: 2, 4, 2, 128>}]} {
    %c0 = arith.constant 0 : index
    %c0_0 = arith.constant 0 : index
    %c0_1 = arith.constant 0 : index
    %c0_2 = arith.constant 0 : index
    %0 = vector.load %arg3[%c0, %c0_0, %c0_1, %c0_2] : memref<2x4x2x128xf32, #tpu.memory_space<vmem>>, vector<2x4x2x128xf32>
    %c0_3 = arith.constant 0 : index
    %c0_4 = arith.constant 0 : index
    %c0_5 = arith.constant 0 : index
    %c0_6 = arith.constant 0 : index
    %1 = vector.load %arg4[%c0_3, %c0_4, %c0_5, %c0_6] : memref<2x4x2x128xf32, #tpu.memory_space<vmem>>, vector<2x4x2x128xf32>
    %2 = arith.mulf %0, %1 : vector<2x4x2x128xf32>
    %c0_7 = arith.constant 0 : index
    %c0_8 = arith.constant 0 : index
    %c0_9 = arith.constant 0 : index
    %c0_10 = arith.constant 0 : index
    %3 = vector.load %arg5[%c0_7, %c0_8, %c0_9, %c0_10] : memref<2x4x2x128xf32, #tpu.memory_space<vmem>>, vector<2x4x2x128xf32>
    tpu.vector_store %arg5[%c0_7, %c0_8, %c0_9, %c0_10], %2 {strides = array<i32>} : memref<2x4x2x128xf32, #tpu.memory_space<vmem>>, vector<2x4x2x128xf32>,
    return
  }
  func.func @transform_0(%arg0: i32, %arg1: i32, %arg2: i32) -> (i32, i32, i32, i32) {
    %c0_i32 = arith.constant 0 : i32
    %c0_i32_0 = arith.constant 0 : i32
    return %arg0, %c0_i32, %arg1, %arg2 : i32, i32, i32, i32
  }
  func.func @transform_1(%arg0: i32, %arg1: i32, %arg2: i32) -> (i32, i32, i32, i32) {
    %c0_i32 = arith.constant 0 : i32
    %c0_i32_0 = arith.constant 0 : i32
    %c0_i32_1 = arith.constant 0 : i32
    %c0_i32_2 = arith.constant 0 : i32
    %c0_i32_3 = arith.constant 0 : i32
    return %c0_i32, %c0_i32_0, %c0_i32_1, %c0_i32_2 : i32, i32, i32, i32
  }
  func.func @transform_2(%arg0: i32, %arg1: i32, %arg2: i32) -> (i32, i32, i32, i32) {
    %c0_i32 = arith.constant 0 : i32
    %c0_i32_0 = arith.constant 0 : i32
    return %arg0, %c0_i32, %arg1, %arg2 : i32, i32, i32, i32
  }
}

</mosaic_0001>

<llo_original>
// kernel: tpu_custom_call.1
$region0: #{tpu_custom_call.1}
  #allocation0 [shape = 'u32[]', space=smem, size = 0x4, offset = 0x4, fixed_abs, tag = 'smem constant byte address 0x4 - core index']
  #allocation1 [shape = 'u32[144,128]{1,0:T(1,128)}', space=vmem, size = 0x12000, scoped, tag = 'internal scratch']
  %s0 = inlined_call_operand.hbm [shape: f32[2,4,2,128], index: 0, kind: input, shape index: {}]
  %s1 = inlined_call_operand.hbm [shape: f32[2,4,2,128], index: 1, kind: input, shape index: {}]
  %s2 = inlined_call_operand.hbm [shape: f32[2,4,2,128], index: 2, kind: output, shape index: {}]
  %s3 = sld [smem:[#allocation0]]
  $region26: #{tpu_custom_call.1} parent=0
    _
  %s5 = ssub.s32 1, %s3
  %s6 = scalar_select 0, %s5, %s3
  $region1: #{tpu_custom_call.1} parent=0
    #allocation2 [shape = 'u8[8192]{0}', space=vmem, size = 0x2000, scoped, tag = 'input window, operand 0, single buffered']
    #allocation3 [shape = 's32[1]{0}', space=sflag, size = 0x4, scoped, tag = 'scoped memory for tpu_custom_call.1']
    #allocation4 [shape = 's32[1]{0}', space=sflag, size = 0x4, scoped, tag = 'scoped memory for tpu_custom_call.1']
    #allocation5 [shape = 'u8[8192]{0}', space=vmem, size = 0x2000, scoped, tag = 'input window, operand 1, single buffered']
    #allocation6 [shape = 's32[1]{0}', space=sflag, size = 0x4, scoped, tag = 'scoped memory for tpu_custom_call.1']
    #allocation7 [shape = 'u8[8192]{0}', space=vmem, size = 0x2000, scoped, tag = 'output window, operand 0, single buffered']
    %7 = vsyncpa [#allocation3], 0
    %8 = vsyncpa [#allocation6], 0
    %9 = vsyncpa [#allocation4], 0
    // Predicated region
    $region2: #{tpu_custom_call.1} parent=1 // pred_check
      _
    $region3: #{tpu_custom_call.1} parent=1 // pred_check_branch
      %11 = sbr.rel (0) target = $region5
    $region4: #{tpu_custom_call.1} parent=1 // pred_region
      %s13 = ssub.s32 256, 256
      %14 = vsyncadd [#allocation3], %s13
      %s15 = sshll.u32 [#allocation2], 4
      %s16 = int_to_ptr.vmem [resolvable:$true] %s15
      %21 = dma.hbm_to_vmem [thread:$0]  %s0, 256, %s16, [#allocation3], 32, 32, 2
    $region5: #{tpu_custom_call.1} parent=1 // pred_fallthru
      _
    // Predicated region
    $region6: #{tpu_custom_call.1} parent=1 // pred_check
      _
    $region7: #{tpu_custom_call.1} parent=1 // pred_check_branch
      %23 = sbr.rel (0) target = $region9
    $region8: #{tpu_custom_call.1} parent=1 // pred_region
      %s25 = ssub.s32 256, 256
      %26 = vsyncadd [#allocation6], %s25
      %s27 = sshll.u32 [#allocation5], 4
      %s28 = int_to_ptr.vmem [resolvable:$true] %s27
      %33 = dma.hbm_to_vmem [thread:$0]  %s1, 256, %s28, [#allocation6], 32, 32, 2
    $region9: #{tpu_custom_call.1} parent=1 // pred_fallthru
      _
    // Predicated region
    $region10: #{tpu_custom_call.1} parent=1 // pred_check
      _
    $region11: #{tpu_custom_call.1} parent=1 // pred_check_branch
      %35 = sbr.rel (0) target = $region13
    $region12: #{tpu_custom_call.1} parent=1 // pred_region
      %36 = dma.done [#allocation3], 256
    $region13: #{tpu_custom_call.1} parent=1 // pred_fallthru
      _
    // Predicated region
    $region14: #{tpu_custom_call.1} parent=1 // pred_check
      _
    $region15: #{tpu_custom_call.1} parent=1 // pred_check_branch
      %38 = sbr.rel (0) target = $region17
    $region16: #{tpu_custom_call.1} parent=1 // pred_region
      %39 = dma.done [#allocation6], 256
    $region17: #{tpu_custom_call.1} parent=1 // pred_fallthru
      _
    %v40 = vld [vmem:[#allocation2] sm:$0x3]
    %v41 = vld [vmem:[#allocation2 + $0x2] sm:$0x3]
    %v42 = vld [vmem:[#allocation2 + $0x4] sm:$0x3]
    %v43 = vld [vmem:[#allocation2 + $0x6] sm:$0x3]
    %v44 = vld [vmem:[#allocation2 + $0x8] sm:$0x3]
    %v45 = vld [vmem:[#allocation2 + $0xa] sm:$0x3]
    %v46 = vld [vmem:[#allocation2 + $0xc] sm:$0x3]
    %v47 = vld [vmem:[#allocation2 + $0xe] sm:$0x3]
    %v48 = vld [vmem:[#allocation5] sm:$0x3]
    %v49 = vld [vmem:[#allocation5 + $0x2] sm:$0x3]
    %v50 = vld [vmem:[#allocation5 + $0x4] sm:$0x3]
    %v51 = vld [vmem:[#allocation5 + $0x6] sm:$0x3]
    %v52 = vld [vmem:[#allocation5 + $0x8] sm:$0x3]
    %v53 = vld [vmem:[#allocation5 + $0xa] sm:$0x3]
    %v54 = vld [vmem:[#allocation5 + $0xc] sm:$0x3]
    %v55 = vld [vmem:[#allocation5 + $0xe] sm:$0x3]
    %v56 = vmul.f32 %v40, %v48
    %v57 = vmul.f32 %v41, %v49
    %v58 = vmul.f32 %v42, %v50
    %v59 = vmul.f32 %v43, %v51
    %v60 = vmul.f32 %v44, %v52
    %v61 = vmul.f32 %v45, %v53
    %v62 = vmul.f32 %v46, %v54
    %v63 = vmul.f32 %v47, %v55
    %64 = vst [vmem:[#allocation7] sm:$0x3] %v56
    %65 = vst [vmem:[#allocation7 + $0x2] sm:$0x3] %v57
    %66 = vst [vmem:[#allocation7 + $0x4] sm:$0x3] %v58
    %67 = vst [vmem:[#allocation7 + $0x6] sm:$0x3] %v59
    %68 = vst [vmem:[#allocation7 + $0x8] sm:$0x3] %v60
    %69 = vst [vmem:[#allocation7 + $0xa] sm:$0x3] %v61
    %70 = vst [vmem:[#allocation7 + $0xc] sm:$0x3] %v62
    %71 = vst [vmem:[#allocation7 + $0xe] sm:$0x3] %v63
    // Predicated region
    $region18: #{tpu_custom_call.1} parent=1 // pred_check
      _
    $region19: #{tpu_custom_call.1} parent=1 // pred_check_branch
      %73 = sbr.rel (0) target = $region21
    $region20: #{tpu_custom_call.1} parent=1 // pred_region
      %s75 = ssub.s32 256, 256
      %76 = vsyncadd [#allocation4], %s75
      %s77 = sshll.u32 [#allocation7], 4
      %s78 = int_to_ptr.vmem [resolvable:$true] %s77
      %83 = dma.vmem_to_hbm [thread:$0]  %s78, 256, %s2, [#allocation4], 32, 32, 2
    $region21: #{tpu_custom_call.1} parent=1 // pred_fallthru
      _
    // Predicated region
    $region22: #{tpu_custom_call.1} parent=1 // pred_check
      _
    $region23: #{tpu_custom_call.1} parent=1 // pred_check_branch
      %85 = sbr.rel (0) target = $region25
    $region24: #{tpu_custom_call.1} parent=1 // pred_region
      %86 = dma.done [#allocation4], 256
    $region25: #{tpu_custom_call.1} parent=1 // pred_fallthru
      _
    %87 = vsyncpa [#allocation3], 1
    %88 = vsyncpa [#allocation6], 1
    %89 = vsyncpa [#allocation4], 1

</llo_original>
